<compile_context>
chip_gen: v7x
topology: tpu7x:2x2x1
jax: 0.10.0
libtpu: 0.0.40
codegen_flags: <defaults>
</compile_context>

<pallas_src>
import functools
import math

import jax
import jax.numpy as jnp
from jax.experimental import pallas as pl
from jax.experimental.pallas import tpu as pltpu


def _round_up(v, m):
    return ((v + m - 1) // m) * m


def _device_kind():
    try:
        return jax.devices()[0].device_kind.lower()
    except Exception:
        return ""


def _pick_row_tile(M, tm_max):
    """Row tile (multiple of 8, <= tm_max) minimizing padded rows; prefers
    >= 2 grid steps (megacore) and larger tiles on ties."""
    m8 = _round_up(max(M, 1), 8)
    if m8 <= 64:
        return m8                     # tiny input: one tile, minimal padding
    cands = [t for t in (256, 128, 64) if t <= tm_max] or [min(tm_max, m8)]

    def score(t):
        mp = _round_up(M, t)
        return (mp - M, 0 if mp // t >= 2 else 1, -t)

    return min(cands, key=score)


def _prenorm_mlp_kernel(x_ref, g_ref, bta_ref, w1_ref, b1_ref, w2_ref, b2_ref,
                        o_ref, *, eps, gelu_approximate):
    # ---- LayerNorm (f32 statistics, centered variance like torch) ----
    xf = x_ref[...].astype(jnp.float32)                       # (tm, C)
    mean = jnp.mean(xf, axis=-1, keepdims=True)
    xc = xf - mean
    var = jnp.mean(xc * xc, axis=-1, keepdims=True)
    xn = xc * jax.lax.rsqrt(var + eps)
    xn = xn * g_ref[...].astype(jnp.float32) + bta_ref[...].astype(jnp.float32)

    # ---- fc1 -> GELU -> fc2 (MXU fed in the weights' dtype, f32 accumulate) ----
    xn = xn.astype(w1_ref.dtype)
    h = jnp.dot(xn, w1_ref[...], preferred_element_type=jnp.float32)
    h = h + b1_ref[...].astype(jnp.float32)
    # tanh-approx GELU runs on the EUP slot (cheap); exact erf is a VPU polynomial.
    h = jax.nn.gelu(h, approximate=gelu_approximate)

    h = h.astype(w2_ref.dtype)
    y = jnp.dot(h, w2_ref[...], preferred_element_type=jnp.float32)
    y = y + b2_ref[...].astype(jnp.float32)

    o_ref[...] = y.astype(o_ref.dtype)


def prenorm_mlp_pallas(x, gamma, beta, w1, b1, w2, b2, *,
                       tm=None, eps=1e-5, gelu_approximate=True,
                       mxu_dtype=None, vmem_limit_bytes=None):
    """x: (B, N, C). gamma/beta: (C,). w1: (C, H), b1: (H,), w2: (H, O), b2: (O,)."""
    B, N, C = x.shape
    H = w1.shape[1]
    O = w2.shape[1]
    M = B * N

    kind = _device_kind()
    if tm is None:
        # v5e MXU is 4x128x128: 256-row tiles buy nothing there, but double the
        # f32 LN/GELU scratch pressure against its single vector-store slot.
        tm = 128 if "v5" in kind else 256

    tm_eff = _pick_row_tile(M, tm)
    Mp = _round_up(M, tm_eff)
    Hp = _round_up(H, 128)            # lane-dense hidden dim (weights only)

    x2 = x.reshape(M, C)
    if Mp != M:
        x2 = jnp.pad(x2, ((0, Mp - M), (0, 0)))   # rows only; channels untouched

    g2 = gamma.reshape(1, C)
    bt2 = beta.reshape(1, C)
    w1p = jnp.pad(w1, ((0, 0), (0, Hp - H)))
    b1p = jnp.pad(b1, (0, Hp - H)).reshape(1, Hp)
    w2p = jnp.pad(w2, ((0, Hp - H), (0, 0)))
    b2p = b2.reshape(1, O)
    if mxu_dtype is not None:                     # e.g. jnp.bfloat16 on v6e/v7x
        w1p = w1p.astype(mxu_dtype)
        w2p = w2p.astype(mxu_dtype)

    # ---- VMEM budget: resident params + double-buffered I/O + f32 scratch ----
    if vmem_limit_bytes is None:
        resident = (g2.size * g2.dtype.itemsize + bt2.size * bt2.dtype.itemsize
                    + w1p.size * w1p.dtype.itemsize + b1p.size * b1p.dtype.itemsize
                    + w2p.size * w2p.dtype.itemsize + b2p.size * b2p.dtype.itemsize)
        io_buf = 2 * tm_eff * (C + O) * x.dtype.itemsize       # double-buffered x/out
        scratch = tm_eff * (2 * C + Hp) * 4                    # f32 LN temps + h spill
        need = resident + io_buf + scratch + (4 << 20)         # + compiler headroom
        cap = (48 << 20) if "v7" in kind else (96 << 20)       # 64 MiB/TC on v7x
        vmem_limit_bytes = int(min(cap, max(need, 32 << 20)))

    kernel = functools.partial(_prenorm_mlp_kernel,
                               eps=float(eps),
                               gelu_approximate=bool(gelu_approximate))

    # Grid-invariant operands: whole array resident in VMEM, no double-buffering.
    resident_spec = pl.BlockSpec(memory_space=pltpu.MemorySpace.VMEM)

    cost = pl.CostEstimate(
        flops=2 * Mp * (C * Hp + Hp * O),
        transcendentals=Mp * Hp,
        bytes_accessed=(x2.size * x2.dtype.itemsize
                        + Mp * O * x.dtype.itemsize
                        + w1p.size * w1p.dtype.itemsize
                        + w2p.size * w2p.dtype.itemsize),
    )

    out = pl.pallas_call(
        kernel,
        out_shape=jax.ShapeDtypeStruct((Mp, O), x.dtype),
        grid_spec=pltpu.PrefetchScalarGridSpec(
            num_scalar_prefetch=0,
            grid=(Mp // tm_eff,),
            in_specs=[
                pl.BlockSpec((tm_eff, C), lambda i: (i, 0)),   # x row tile
                resident_spec,   # gamma
                resident_spec,   # beta
                resident_spec,   # w1
                resident_spec,   # b1
                resident_spec,   # w2
                resident_spec,   # b2
            ],
            out_specs=pl.BlockSpec((tm_eff, O), lambda i: (i, 0)),
        ),
        compiler_params=pltpu.CompilerParams(
            dimension_semantics=("parallel",),   # M-tiles independent -> 2 TCs on v7x
            vmem_limit_bytes=vmem_limit_bytes,
        ),
        cost_estimate=cost,
    )(x2, g2, bt2, w1p, b1p, w2p, b2p)

    if Mp != M:
        out = out[:M]
    return out.reshape(B, N, O)


def prenorm_mlp_reference(x, gamma, beta, w1, b1, w2, b2, eps=1e-5,
                          gelu_approximate=True):
    mean = jnp.mean(x, axis=-1, keepdims=True)
    xc = x - mean
    var = jnp.mean(jnp.square(xc), axis=-1, keepdims=True)
    xn = xc * jax.lax.rsqrt(var + eps) * gamma + beta
    h = jnp.einsum("bnc,ch->bnh", xn, w1) + b1
    h = jax.nn.gelu(h, approximate=gelu_approximate)
    return jnp.einsum("bnh,ho->bno", h, w2) + b2


if __name__ == "__main__":
    def make_params(key, C, H, O):
        kg, kb, kw1, kb1, kw2, kb2 = jax.random.split(key, 6)
        gamma = 1.0 + 0.1 * jax.random.normal(kg, (C,), dtype=jnp.float32)
        beta = 0.1 * jax.random.normal(kb, (C,), dtype=jnp.float32)
        lim1 = 1.0 / math.sqrt(C)
        lim2 = 1.0 / math.sqrt(H)
        w1 = jax.random.uniform(kw1, (C, H), minval=-lim1, maxval=lim1, dtype=jnp.float32)
        b1 = jax.random.uniform(kb1, (H,), minval=-lim1, maxval=lim1, dtype=jnp.float32)
        w2 = jax.random.uniform(kw2, (H, O), minval=-lim2, maxval=lim2, dtype=jnp.float32)
        b2 = jax.random.uniform(kb2, (O,), minval=-lim2, maxval=lim2, dtype=jnp.float32)
        return gamma, beta, w1, b1, w2, b2

    key = jax.random.PRNGKey(0)
    k1, k2, k3, k4 = jax.random.split(key, 4)

    # Case 1: lane-aligned dims, M=128 -> two 64-row tiles (both TCs on v7x),
    # default tanh-approx GELU.
    B, N, C, H, O = 2, 64, 128, 256, 128
    x = jax.random.normal(k1, (B, N, C), dtype=jnp.float32)
    params = make_params(k2, C, H, O)
    y = jax.block_until_ready(prenorm_mlp_pallas(x, *params))
    y_ref = prenorm_mlp_reference(x, *params)
    assert jnp.allclose(y, y_ref, atol=1e-3, rtol=1e-3), "case1 mismatch vs reference"

    # Case 2: unaligned channels / rows (C=48, M=20 -> padded to 24 rows),
    # exact erf GELU for PyTorch bit-parity path.
    B, N, C, H, O = 2, 10, 48, 80, 48
    x = jax.random.normal(k3, (B, N, C), dtype=jnp.float32)
    params = make_params(k4, C, H, O)
    y = jax.block_until_ready(
        prenorm_mlp_pallas(x, *params, gelu_approximate=False))
    y_ref = prenorm_mlp_reference(x, *params, gelu_approximate=False)
    assert jnp.allclose(y, y_ref, atol=1e-3, rtol=1e-3), "case2 mismatch vs reference"

    print("KERNEL_OK")
</pallas_src>

<mosaic_0001>
module attributes {stable_mosaic.version = 11 : i64} {
  func.func @_prenorm_mlp_kernel(%arg0: i32, %arg1: memref<64x128xf32, #tpu.memory_space<vmem>>, %arg2: memref<1x128xf32, #tpu.memory_space<vmem>>, %arg3: memref<1x128xf32, #tpu.memory_space<vmem>>, %arg4: memref<128x256xf32, #tpu.memory_space<vmem>>, %arg5: memref<1x256xf32, #tpu.memory_space<vmem>>, %arg6: memref<256x128xf32, #tpu.memory_space<vmem>>, %arg7: memref<1x128xf32, #tpu.memory_space<vmem>>, %arg8: memref<64x128xf32, #tpu.memory_space<vmem>>) attributes {dimension_semantics = [#tpu.dimension_semantics<parallel>], iteration_bounds = array<i64: 2>, scalar_prefetch = 0 : i64, scratch_operands = 0 : i64, tpu.core_type = #tpu.core_type<tc>, window_params = [{transform_indices = @transform_0, window_bounds = array<i64: 64, 128>}, {pipeline_mode = #tpu.pipeline_mode<synchronous>, transform_indices = @transform_1, window_bounds = array<i64: 1, 128>}, {pipeline_mode = #tpu.pipeline_mode<synchronous>, transform_indices = @transform_2, window_bounds = array<i64: 1, 128>}, {pipeline_mode = #tpu.pipeline_mode<synchronous>, transform_indices = @transform_3, window_bounds = array<i64: 128, 256>}, {pipeline_mode = #tpu.pipeline_mode<synchronous>, transform_indices = @transform_4, window_bounds = array<i64: 1, 256>}, {pipeline_mode = #tpu.pipeline_mode<synchronous>, transform_indices = @transform_5, window_bounds = array<i64: 256, 128>}, {pipeline_mode = #tpu.pipeline_mode<synchronous>, transform_indices = @transform_6, window_bounds = array<i64: 1, 128>}, {transform_indices = @transform_7, window_bounds = array<i64: 64, 128>}]} {
    %c0 = arith.constant 0 : index
    %c0_0 = arith.constant 0 : index
    %0 = vector.load %arg1[%c0, %c0_0] : memref<64x128xf32, #tpu.memory_space<vmem>>, vector<64x128xf32>
    %cst = arith.constant dense<0.000000e+00> : vector<64xf32>
    %1 = vector.multi_reduction <add>, %0, %cst [1] : vector<64x128xf32> to vector<64xf32>
    %2 = vector.shape_cast %1 : vector<64xf32> to vector<64x1xf32>
    %cst_1 = arith.constant 1.280000e+02 : f32
    %3 = vector.broadcast %cst_1 : f32 to vector<64x1xf32>
    %4 = arith.divf %2, %3 : vector<64x1xf32>
    %5 = vector.broadcast %4 : vector<64x1xf32> to vector<64x128xf32>
    %6 = arith.subf %0, %5 : vector<64x128xf32>
    %7 = arith.mulf %6, %6 : vector<64x128xf32>
    %cst_2 = arith.constant dense<0.000000e+00> : vector<64xf32>
    %8 = vector.multi_reduction <add>, %7, %cst_2 [1] : vector<64x128xf32> to vector<64xf32>
    %9 = vector.shape_cast %8 : vector<64xf32> to vector<64x1xf32>
    %cst_3 = arith.constant 1.280000e+02 : f32
    %10 = vector.broadcast %cst_3 : f32 to vector<64x1xf32>
    %11 = arith.divf %9, %10 : vector<64x1xf32>
    %cst_4 = arith.constant 9.99999974E-6 : f32
    %12 = vector.broadcast %cst_4 : f32 to vector<64x1xf32>
    %13 = arith.addf %11, %12 : vector<64x1xf32>
    %14 = math.rsqrt %13 : vector<64x1xf32>
    %15 = vector.broadcast %14 : vector<64x1xf32> to vector<64x128xf32>
    %16 = arith.mulf %6, %15 : vector<64x128xf32>
    %c0_5 = arith.constant 0 : index
    %c0_6 = arith.constant 0 : index
    %17 = vector.load %arg2[%c0_5, %c0_6] : memref<1x128xf32, #tpu.memory_space<vmem>>, vector<1x128xf32>
    %18 = vector.broadcast %17 : vector<1x128xf32> to vector<64x128xf32>
    %19 = arith.mulf %16, %18 : vector<64x128xf32>
    %c0_7 = arith.constant 0 : index
    %c0_8 = arith.constant 0 : index
    %20 = vector.load %arg3[%c0_7, %c0_8] : memref<1x128xf32, #tpu.memory_space<vmem>>, vector<1x128xf32>
    %21 = vector.broadcast %20 : vector<1x128xf32> to vector<64x128xf32>
    %22 = arith.addf %19, %21 : vector<64x128xf32>
    %c0_9 = arith.constant 0 : index
    %c0_10 = arith.constant 0 : index
    %23 = vector.load %arg4[%c0_9, %c0_10] : memref<128x256xf32, #tpu.memory_space<vmem>>, vector<128x256xf32>
    %cst_11 = arith.constant dense<0.000000e+00> : vector<64x256xf32>
    %24 = tpu.matmul %22, %23, %cst_11 {dimension_numbers = #tpu.dot_dimension_numbers<[1], [0], [0], [1], [0, 0, 1, 1], [], []>} : vector<64x128xf32>, vector<128x256xf32>, vector<64x256xf32> -> vector<64x256xf32>
    %c0_12 = arith.constant 0 : index
    %c0_13 = arith.constant 0 : index
    %25 = vector.load %arg5[%c0_12, %c0_13] : memref<1x256xf32, #tpu.memory_space<vmem>>, vector<1x256xf32>
    %26 = vector.broadcast %25 : vector<1x256xf32> to vector<64x256xf32>
    %27 = arith.addf %24, %26 : vector<64x256xf32>
    %28 = arith.mulf %27, %27 : vector<64x256xf32>
    %29 = arith.mulf %27, %28 : vector<64x256xf32>
    %cst_14 = arith.constant 4.471500e-02 : f32
    %30 = vector.broadcast %cst_14 : f32 to vector<64x256xf32>
    %31 = arith.mulf %30, %29 : vector<64x256xf32>
    %32 = arith.addf %27, %31 : vector<64x256xf32>
    %cst_15 = arith.constant 0.797884583 : f32
    %33 = vector.broadcast %cst_15 : f32 to vector<64x256xf32>
    %34 = arith.mulf %33, %32 : vector<64x256xf32>
    %35 = math.tanh %34 : vector<64x256xf32>
    %cst_16 = arith.constant 1.000000e+00 : f32
    %36 = vector.broadcast %cst_16 : f32 to vector<64x256xf32>
    %37 = arith.addf %36, %35 : vector<64x256xf32>
    %cst_17 = arith.constant 5.000000e-01 : f32
    %38 = vector.broadcast %cst_17 : f32 to vector<64x256xf32>
    %39 = arith.mulf %38, %37 : vector<64x256xf32>
    %40 = arith.mulf %27, %39 : vector<64x256xf32>
    %c0_18 = arith.constant 0 : index
    %c0_19 = arith.constant 0 : index
    %41 = vector.load %arg6[%c0_18, %c0_19] : memref<256x128xf32, #tpu.memory_space<vmem>>, vector<256x128xf32>
    %cst_20 = arith.constant dense<0.000000e+00> : vector<64x128xf32>
    %42 = tpu.matmul %40, %41, %cst_20 {dimension_numbers = #tpu.dot_dimension_numbers<[1], [0], [0], [1], [0, 0, 1, 1], [], []>} : vector<64x256xf32>, vector<256x128xf32>, vector<64x128xf32> -> vector<64x128xf32>
    %c0_21 = arith.constant 0 : index
    %c0_22 = arith.constant 0 : index
    %43 = vector.load %arg7[%c0_21, %c0_22] : memref<1x128xf32, #tpu.memory_space<vmem>>, vector<1x128xf32>
    %44 = vector.broadcast %43 : vector<1x128xf32> to vector<64x128xf32>
    %45 = arith.addf %42, %44 : vector<64x128xf32>
    %c0_23 = arith.constant 0 : index
    %c0_24 = arith.constant 0 : index
    %46 = vector.load %arg8[%c0_23, %c0_24] : memref<64x128xf32, #tpu.memory_space<vmem>>, vector<64x128xf32>
    tpu.vector_store %arg8[%c0_23, %c0_24], %45 {strides = array<i32>} : memref<64x128xf32, #tpu.memory_space<vmem>>, vector<64x128xf32>,
    return
  }
  func.func @transform_0(%arg0: i32) -> (i32, i32) {
    %c0_i32 = arith.constant 0 : i32
    %c0_i32_0 = arith.constant 0 : i32
    return %arg0, %c0_i32 : i32, i32
  }
  func.func @transform_1(%arg0: i32) -> (i32, i32) {
    %c0_i32 = arith.constant 0 : i32
    %c0_i32_0 = arith.constant 0 : i32
    %c0_i32_1 = arith.constant 0 : i32
    return %c0_i32, %c0_i32_0 : i32, i32
  }
  func.func @transform_2(%arg0: i32) -> (i32, i32) {
    %c0_i32 = arith.constant 0 : i32
    %c0_i32_0 = arith.constant 0 : i32
    %c0_i32_1 = arith.constant 0 : i32
    return %c0_i32, %c0_i32_0 : i32, i32
  }
  func.func @transform_3(%arg0: i32) -> (i32, i32) {
    %c0_i32 = arith.constant 0 : i32
    %c0_i32_0 = arith.constant 0 : i32
    %c0_i32_1 = arith.constant 0 : i32
    return %c0_i32, %c0_i32_0 : i32, i32
  }
  func.func @transform_4(%arg0: i32) -> (i32, i32) {
    %c0_i32 = arith.constant 0 : i32
    %c0_i32_0 = arith.constant 0 : i32
    %c0_i32_1 = arith.constant 0 : i32
    return %c0_i32, %c0_i32_0 : i32, i32
  }
  func.func @transform_5(%arg0: i32) -> (i32, i32) {
    %c0_i32 = arith.constant 0 : i32
    %c0_i32_0 = arith.constant 0 : i32
    %c0_i32_1 = arith.constant 0 : i32
    return %c0_i32, %c0_i32_0 : i32, i32
  }
  func.func @transform_6(%arg0: i32) -> (i32, i32) {
    %c0_i32 = arith.constant 0 : i32
    %c0_i32_0 = arith.constant 0 : i32
    %c0_i32_1 = arith.constant 0 : i32
    return %c0_i32, %c0_i32_0 : i32, i32
  }
  func.func @transform_7(%arg0: i32) -> (i32, i32) {
    %c0_i32 = arith.constant 0 : i32
    %c0_i32_0 = arith.constant 0 : i32
    return %arg0, %c0_i32 : i32, i32
  }
}

</mosaic_0001>

<llo_original>
// kernel: tpu_custom_call.1
$region0: #{tpu_custom_call.1}
  #allocation0 [shape = 'u32[]', space=smem, size = 0x4, offset = 0x4, fixed_abs, tag = 'smem constant byte address 0x4 - core index']
  #allocation1 [shape = 'u32[144,128]{1,0:T(1,128)}', space=vmem, size = 0x12000, scoped, tag = 'internal scratch']
  %s0 = inlined_call_operand.hbm [shape: f32[128,128], index: 0, kind: input, shape index: {}]
  %s1 = inlined_call_operand.vmem [shape: f32[1,128], index: 1, kind: input, shape index: {}]
  %s2 = inlined_call_operand.vmem [shape: f32[1,128], index: 2, kind: input, shape index: {}]
  %s3 = inlined_call_operand.hbm [shape: f32[128,256], index: 3, kind: input, shape index: {}]
  %s4 = inlined_call_operand.vmem [shape: f32[1,256], index: 4, kind: input, shape index: {}]
  %s5 = inlined_call_operand.hbm [shape: f32[256,128], index: 5, kind: input, shape index: {}]
  %s6 = inlined_call_operand.vmem [shape: f32[1,128], index: 6, kind: input, shape index: {}]
  %s7 = inlined_call_operand.hbm [shape: f32[128,128], index: 7, kind: output, shape index: {}]
  %s8 = sld [smem:[#allocation0]]
  $region73: #{tpu_custom_call.1} parent=0
    _
  %s10 = ssub.s32 1, %s8
  %s11 = scalar_select 0, %s10, %s8
  $region1: #{tpu_custom_call.1} parent=0
    #allocation2 [shape = 'u8[65536]{0}', space=vmem, size = 0x10000, scoped, tag = 'input window, operand 0']
    #allocation3 [shape = 's32[2]{0}', space=sflag, size = 0x8, scoped, tag = 'scoped memory for tpu_custom_call.1']
    #allocation4 [shape = 's32[2]{0}', space=sflag, size = 0x8, scoped, tag = 'scoped memory for tpu_custom_call.1']
    #allocation5 [shape = 'u8[131072]{0}', space=vmem, size = 0x20000, scoped, tag = 'input window, operand 3, single buffered']
    #allocation6 [shape = 's32[1]{0}', space=sflag, size = 0x4, scoped, tag = 'scoped memory for tpu_custom_call.1']
    #allocation7 [shape = 'u8[131072]{0}', space=vmem, size = 0x20000, scoped, tag = 'input window, operand 5, single buffered']
    #allocation8 [shape = 'u8[65536]{0}', space=vmem, size = 0x10000, scoped, tag = 'output window, operand 0']
    %12 = vsyncpa [#allocation3], 0
    %s13 = scalar_lea.sflag [#allocation3], 1
    %14 = vsyncpa %s13, 0
    %15 = vsyncpa [#allocation6], 0
    %16 = vsyncpa [#allocation4], 0
    %s17 = scalar_lea.sflag [#allocation4], 1
    %18 = vsyncpa %s17, 0
    loop: start=0, step=1, limit=4
    $region2: #{tpu_custom_call.1} parent=1 // loop_pre_header
      _
    $region3: #{tpu_custom_call.1} parent=1 // loop_header
      %s20 = sphi 0, %s24
      %p21 = scmp.ge.s32.totalorder %s20, 4
      %s30 = sphi 0, %s32
      %s33 = sphi 0, %s30
      %s34 = sphi 0, %s33
      %s50 = sphi 0, %s34
      %s54 = sphi 0, %s54
      %s56 = sphi 0, %s54
      %s57 = sphi 0, %s56
      %s71 = sphi 0, %s57
      %s75 = sphi 0, %s75
      %s77 = sphi 0, %s75
      %s78 = sphi 0, %s77
      %s92 = sphi 0, %s78
      %s96 = sphi 0, %s96
      %s98 = sphi 0, %s96
      %s99 = sphi 0, %s98
      %s113 = sphi 0, %s99
      %s117 = sphi 0, %s117
      %s119 = sphi 0, %s117
      %s120 = sphi 0, %s119
      %s134 = sphi 0, %s120
      %s138 = sphi 0, %s138
      %s140 = sphi 0, %s138
      %s141 = sphi 0, %s140
      %s155 = sphi 0, %s141
      %s159 = sphi 0, %s159
      %s161 = sphi 0, %s159
      %s162 = sphi 0, %s161
      %s176 = sphi 0, %s162
      %s182 = sphi 0, %s184
      %s185 = sphi 0, %s182
      %s186 = sphi 0, %s185
      %s202 = sphi 0, %s186
    $region4: #{tpu_custom_call.1} parent=1 // loop_header_branch
      %23 = sbr.rel (%p21) target = $region8
    $region5: #{tpu_custom_call.1} parent=1 // loop_body
      %s25 = ssub.s32 %s20, 1
      %s26 = ssub.s32 %s20, 2
      %s27 = sadd.s32 %s20, 1
      %s28 = ssub.s32 %s20, %s27
      %p29 = scmp.eq.s32.totalorder %s28, 0
      %s31 = sadd.s32 %s30, 1
      %s32 = scalar_select %p29, %s30, %s31
      %p35 = pneg %p29
      %p36 = scmp.eq.s32.totalorder %s20, 1
      %p37 = por %p35, %p36
      %p38 = scmp.ne.s32.totalorder %s30, %s33
      %p39 = scmp.eq.s32.totalorder %s20, 0
      %p40 = por %p38, %p39
      %p41 = scmp.ne.s32.totalorder %s30, %s33
      %p42 = scmp.eq.s32.totalorder %s25, 1
      %p43 = por %p41, %p42
      %p44 = scmp.ne.s32.totalorder %s33, %s34
      %p45 = scmp.eq.s32.totalorder %s25, 0
      %p46 = por %p44, %p45
      %p47 = scmp.ne.s32.totalorder %s33, %s34
      %p48 = scmp.eq.s32.totalorder %s26, 1
      %p49 = por %p47, %p48
      %p51 = scmp.ne.s32.totalorder %s34, %s50
      %p52 = scmp.eq.s32.totalorder %s26, 0
      %p53 = por %p51, %p52
      %s55 = sadd.s32 %s54, 1
      %p58 = scmp.eq.s32.totalorder %s20, 1
      %p59 = scmp.ne.s32.totalorder %s54, %s56
      %p60 = scmp.eq.s32.totalorder %s20, 0
      %p61 = por %p59, %p60
      %p62 = scmp.ne.s32.totalorder %s54, %s56
      %p63 = scmp.eq.s32.totalorder %s25, 1
      %p64 = por %p62, %p63
      %p65 = scmp.ne.s32.totalorder %s56, %s57
      %p66 = scmp.eq.s32.totalorder %s25, 0
      %p67 = por %p65, %p66
      %p68 = scmp.ne.s32.totalorder %s56, %s57
      %p69 = scmp.eq.s32.totalorder %s26, 1
      %p70 = por %p68, %p69
      %p72 = scmp.ne.s32.totalorder %s57, %s71
      %p73 = scmp.eq.s32.totalorder %s26, 0
      %p74 = por %p72, %p73
      %s76 = sadd.s32 %s75, 1
      %p79 = scmp.eq.s32.totalorder %s20, 1
      %p80 = scmp.ne.s32.totalorder %s75, %s77
      %p81 = scmp.eq.s32.totalorder %s20, 0
      %p82 = por %p80, %p81
      %p83 = scmp.ne.s32.totalorder %s75, %s77
      %p84 = scmp.eq.s32.totalorder %s25, 1
      %p85 = por %p83, %p84
      %p86 = scmp.ne.s32.totalorder %s77, %s78
      %p87 = scmp.eq.s32.totalorder %s25, 0
      %p88 = por %p86, %p87
      %p89 = scmp.ne.s32.totalorder %s77, %s78
      %p90 = scmp.eq.s32.totalorder %s26, 1
      %p91 = por %p89, %p90
      %p93 = scmp.ne.s32.totalorder %s78, %s92
      %p94 = scmp.eq.s32.totalorder %s26, 0
      %p95 = por %p93, %p94
      %s97 = sadd.s32 %s96, 1
      %p100 = scmp.eq.s32.totalorder %s20, 1
      %p101 = scmp.ne.s32.totalorder %s96, %s98
      %p102 = scmp.eq.s32.totalorder %s20, 0
      %p103 = por %p101, %p102
      %p104 = scmp.ne.s32.totalorder %s96, %s98
      %p105 = scmp.eq.s32.totalorder %s25, 1
      %p106 = por %p104, %p105
      %p107 = scmp.ne.s32.totalorder %s98, %s99
      %p108 = scmp.eq.s32.totalorder %s25, 0
      %p109 = por %p107, %p108
      %p110 = scmp.ne.s32.totalorder %s98, %s99
      %p111 = scmp.eq.s32.totalorder %s26, 1
      %p112 = por %p110, %p111
      %p114 = scmp.ne.s32.totalorder %s99, %s113
      %p115 = scmp.eq.s32.totalorder %s26, 0
      %p116 = por %p114, %p115
      %s118 = sadd.s32 %s117, 1
      %p121 = scmp.eq.s32.totalorder %s20, 1
      %p122 = scmp.ne.s32.totalorder %s117, %s119
      %p123 = scmp.eq.s32.totalorder %s20, 0
      %p124 = por %p122, %p123
      %p125 = scmp.ne.s32.totalorder %s117, %s119
      %p126 = scmp.eq.s32.totalorder %s25, 1
      %p127 = por %p125, %p126
      %p128 = scmp.ne.s32.totalorder %s119, %s120
      %p129 = scmp.eq.s32.totalorder %s25, 0
      %p130 = por %p128, %p129
      %p131 = scmp.ne.s32.totalorder %s119, %s120
      %p132 = scmp.eq.s32.totalorder %s26, 1
      %p133 = por %p131, %p132
      %p135 = scmp.ne.s32.totalorder %s120, %s134
      %p136 = scmp.eq.s32.totalorder %s26, 0
      %p137 = por %p135, %p136
      %s139 = sadd.s32 %s138, 1
      %p142 = scmp.eq.s32.totalorder %s20, 1
      %p143 = scmp.ne.s32.totalorder %s138, %s140
      %p144 = scmp.eq.s32.totalorder %s20, 0
      %p145 = por %p143, %p144
      %p146 = scmp.ne.s32.totalorder %s138, %s140
      %p147 = scmp.eq.s32.totalorder %s25, 1
      %p148 = por %p146, %p147
      %p149 = scmp.ne.s32.totalorder %s140, %s141
      %p150 = scmp.eq.s32.totalorder %s25, 0
      %p151 = por %p149, %p150
      %p152 = scmp.ne.s32.totalorder %s140, %s141
      %p153 = scmp.eq.s32.totalorder %s26, 1
      %p154 = por %p152, %p153
      %p156 = scmp.ne.s32.totalorder %s141, %s155
      %p157 = scmp.eq.s32.totalorder %s26, 0
      %p158 = por %p156, %p157
      %s160 = sadd.s32 %s159, 1
      %p163 = scmp.eq.s32.totalorder %s20, 1
      %p164 = scmp.ne.s32.totalorder %s159, %s161
      %p165 = scmp.eq.s32.totalorder %s20, 0
      %p166 = por %p164, %p165
      %p167 = scmp.ne.s32.totalorder %s159, %s161
      %p168 = scmp.eq.s32.totalorder %s25, 1
      %p169 = por %p167, %p168
      %p170 = scmp.ne.s32.totalorder %s161, %s162
      %p171 = scmp.eq.s32.totalorder %s25, 0
      %p172 = por %p170, %p171
      %p173 = scmp.ne.s32.totalorder %s161, %s162
      %p174 = scmp.eq.s32.totalorder %s26, 1
      %p175 = por %p173, %p174
      %p177 = scmp.ne.s32.totalorder %s162, %s176
      %p178 = scmp.eq.s32.totalorder %s26, 0
      %p179 = por %p177, %p178
      %s180 = ssub.s32 %s20, %s27
      %p181 = scmp.eq.s32.totalorder %s180, 0
      %s183 = sadd.s32 %s182, 1
      %s184 = scalar_select %p181, %s182, %s183
      %p187 = pneg %p181
      %p188 = scmp.eq.s32.totalorder %s20, 1
      %p189 = por %p187, %p188
      %p190 = scmp.ne.s32.totalorder %s182, %s185
      %p191 = scmp.eq.s32.totalorder %s20, 0
      %p192 = por %p190, %p191
      %p193 = scmp.ne.s32.totalorder %s182, %s185
      %p194 = scmp.eq.s32.totalorder %s25, 1
      %p195 = por %p193, %p194
      %p196 = scmp.ne.s32.totalorder %s185, %s186
      %p197 = scmp.eq.s32.totalorder %s25, 0
      %p198 = por %p196, %p197
      %p199 = scmp.ne.s32.totalorder %s185, %s186
      %p200 = scmp.eq.s32.totalorder %s26, 1
      %p201 = por %p199, %p200
      %p203 = scmp.ne.s32.totalorder %s186, %s202
      %p204 = scmp.eq.s32.totalorder %s26, 0
      %p205 = por %p203, %p204
      %p206 = scmp.le.s32.totalorder 1, %s20
      %p207 = scmp.lt.s32.totalorder %s20, 3
      %p208 = pnand %p206, %p207
      %p209 = pneg %p208
      // Predicated region
      $region9: #{tpu_custom_call.1} parent=5 // pred_check
        _
      $region10: #{tpu_custom_call.1} parent=5 // pred_check_branch
        %211 = sbr.rel (%p208) target = $region12
      $region11: #{tpu_custom_call.1} parent=5 // pred_region
        %s212 = ssub.s32 %s20, 1
        // Predicated region
        $region13: #{tpu_custom_call.1} parent=11 // pred_check
          %p213 = pneg %p67
        $region14: #{tpu_custom_call.1} parent=11 // pred_check_branch
          %215 = sbr.rel (%p213) target = $region16
        $region15: #{tpu_custom_call.1} parent=11 // pred_region
          _
        $region16: #{tpu_custom_call.1} parent=11 // pred_fallthru
          _
        // Predicated region
        $region17: #{tpu_custom_call.1} parent=11 // pred_check
          %p216 = pneg %p88
        $region18: #{tpu_custom_call.1} parent=11 // pred_check_branch
          %218 = sbr.rel (%p216) target = $region20
        $region19: #{tpu_custom_call.1} parent=11 // pred_region
          _
        $region20: #{tpu_custom_call.1} parent=11 // pred_fallthru
          _
        // Predicated region
        $region21: #{tpu_custom_call.1} parent=11 // pred_check
          %p219 = pneg %p109
        $region22: #{tpu_custom_call.1} parent=11 // pred_check_branch
          %221 = sbr.rel (%p219) target = $region24
        $region23: #{tpu_custom_call.1} parent=11 // pred_region
          %s223 = ssub.s32 4096, 4096
          %224 = vsyncadd [#allocation6], %s223
          %s225 = sshll.u32 [#allocation5], 4
          %s226 = int_to_ptr.vmem [resolvable:$true] %s225
          %231 = dma.hbm_to_vmem [thread:$0]  %s3, 4096, %s226, [#allocation6], 256, 256, 16
        $region24: #{tpu_custom_call.1} parent=11 // pred_fallthru
          _
        // Predicated region
        $region25: #{tpu_custom_call.1} parent=11 // pred_check
          %p232 = pneg %p130
        $region26: #{tpu_custom_call.1} parent=11 // pred_check_branch
          %234 = sbr.rel (%p232) target = $region28
        $region27: #{tpu_custom_call.1} parent=11 // pred_region
          _
        $region28: #{tpu_custom_call.1} parent=11 // pred_fallthru
          _
        // Predicated region
        $region29: #{tpu_custom_call.1} parent=11 // pred_check
          %p235 = pneg %p151
        $region30: #{tpu_custom_call.1} parent=11 // pred_check_branch
          %237 = sbr.rel (%p235) target = $region32
        $region31: #{tpu_custom_call.1} parent=11 // pred_region
          %s239 = ssub.s32 4096, 4096
          %240 = vsyncadd [#allocation6], %s239
          %s241 = sshll.u32 [#allocation7], 4
          %s242 = int_to_ptr.vmem [resolvable:$true] %s241
          %247 = dma.hbm_to_vmem [thread:$0]  %s5, 4096, %s242, [#allocation6], 128, 128, 8
        $region32: #{tpu_custom_call.1} parent=11 // pred_fallthru
          _
        // Predicated region
        $region33: #{tpu_custom_call.1} parent=11 // pred_check
          %p248 = pneg %p172
        $region34: #{tpu_custom_call.1} parent=11 // pred_check_branch
          %250 = sbr.rel (%p248) target = $region36
        $region35: #{tpu_custom_call.1} parent=11 // pred_region
          _
        $region36: #{tpu_custom_call.1} parent=11 // pred_fallthru
          _
      $region12: #{tpu_custom_call.1} parent=5 // pred_fallthru
        _
      %p251 = scmp.lt.s32.totalorder %s20, 2
      // Predicated region
      $region37: #{tpu_custom_call.1} parent=5 // pred_check
        %p252 = pneg %p251
      $region38: #{tpu_custom_call.1} parent=5 // pred_check_branch
        %254 = sbr.rel (%p252) target = $region40
      $region39: #{tpu_custom_call.1} parent=5 // pred_region
        // Predicated region
        $region41: #{tpu_custom_call.1} parent=39 // pred_check
          %p255 = pneg %p40
        $region42: #{tpu_custom_call.1} parent=39 // pred_check_branch
          %257 = sbr.rel (%p255) target = $region44
        $region43: #{tpu_custom_call.1} parent=39 // pred_region
          %s258 = sand.u32 %s30, 1
          %s259 = scalar_lea.sflag [#allocation3], %s258
          %s260 = sand.u32 %s30, 1
          %s261 = smul.addr %s260, 64
          %s262 = scalar_lea.vmem [#allocation2], %s261
          %s263 = smul.u32 8, %s20
          %s265 = ssub.s32 1024, 1024
          %266 = vsyncadd %s259, %s265
          %s267 = smul.addr %s263, 128
          %s268 = scalar_lea.hbm %s0, %s267
          %s269 = sshll.u32 %s262, 4
          %s270 = int_to_ptr.vmem [resolvable:$true] %s269
          %275 = dma.hbm_to_vmem [thread:$0]  %s268, 1024, %s270, %s259, 128, 128, 8
        $region44: #{tpu_custom_call.1} parent=39 // pred_fallthru
          _
      $region40: #{tpu_custom_call.1} parent=5 // pred_fallthru
        _
      %p276 = scmp.le.s32.totalorder 1, %s20
      %p277 = scmp.lt.s32.totalorder %s20, 3
      %p278 = pnand %p276, %p277
      %p279 = pneg %p278
      // Predicated region
      $region45: #{tpu_custom_call.1} parent=5 // pred_check
        _
      $region46: #{tpu_custom_call.1} parent=5 // pred_check_branch
        %281 = sbr.rel (%p278) target = $region48
      $region47: #{tpu_custom_call.1} parent=5 // pred_region
        %s282 = ssub.s32 %s20, 1
        %s283 = sand.u32 %s33, 1
        %s284 = scalar_lea.sflag [#allocation3], %s283
        %s285 = sand.u32 %s33, 1
        %s286 = smul.addr %s285, 64
        %s287 = scalar_lea.vmem [#allocation2], %s286
        // Predicated region
        $region49: #{tpu_custom_call.1} parent=47 // pred_check
          %p288 = pneg %p46
        $region50: #{tpu_custom_call.1} parent=47 // pred_check_branch
          %290 = sbr.rel (%p288) target = $region52
        $region51: #{tpu_custom_call.1} parent=47 // pred_region
          %291 = dma.done %s284, 1024
        $region52: #{tpu_custom_call.1} parent=47 // pred_fallthru
          _
        // Predicated region
        $region53: #{tpu_custom_call.1} parent=47 // pred_check
          %p292 = pneg %p109
        $region54: #{tpu_custom_call.1} parent=47 // pred_check_branch
          %294 = sbr.rel (%p292) target = $region56
        $region55: #{tpu_custom_call.1} parent=47 // pred_region
          %295 = dma.done [#allocation6], 4096
        $region56: #{tpu_custom_call.1} parent=47 // pred_fallthru
          _
        // Predicated region
        $region57: #{tpu_custom_call.1} parent=47 // pred_check
          %p296 = pneg %p151
        $region58: #{tpu_custom_call.1} parent=47 // pred_check_branch
          %298 = sbr.rel (%p296) target = $region60
        $region59: #{tpu_custom_call.1} parent=47 // pred_region
          %299 = dma.done [#allocation6], 4096
        $region60: #{tpu_custom_call.1} parent=47 // pred_fallthru
          _
        %s300 = sand.u32 %s33, 1
        %s301 = scalar_lea.sflag [#allocation3], %s300
        %s302 = sand.u32 %s33, 1
        %s303 = smul.addr %s302, 64
        %s304 = scalar_lea.vmem [#allocation2], %s303
        %p305 = pneg %p46
        %p306 = pneg %p43
        %p307 = pneg %p67
        %p308 = pneg %p64
        %p309 = pneg %p88
        %p310 = pneg %p85
        %p311 = pneg %p109
        %p312 = pneg %p106
        %p313 = pneg %p130
        %p314 = pneg %p127
        %p315 = pneg %p151
        %p316 = pneg %p148
        %p317 = pneg %p172
        %p318 = pneg %p169
        %p319 = pneg %p198
        %p320 = pneg %p195
        %s321 = sand.u32 %s185, 1
        %s322 = scalar_lea.sflag [#allocation4], %s321
        %s323 = sand.u32 %s185, 1
        %s324 = smul.addr %s323, 64
        %s325 = scalar_lea.vmem [#allocation8], %s324
        %s326 = smul.u32 8, %s25
        %s327 = smul.u32 8, %s25
        %v328 = vld [vmem:[%s287] sm:$0xff]
        %v329 = vld [vmem:[%s287 + $0x8] sm:$0xff]
        %v330 = vld [vmem:[%s287 + $0x10] sm:$0xff]
        %v331 = vld [vmem:[%s287 + $0x18] sm:$0xff]
        %v332 = vld [vmem:[%s287 + $0x20] sm:$0xff]
        %v333 = vld [vmem:[%s287 + $0x28] sm:$0xff]
        %v334 = vld [vmem:[%s287 + $0x30] sm:$0xff]
        %v335 = vld [vmem:[%s287 + $0x38] sm:$0xff]
        %336 = vadd.xlane.f32.xlu0 %v328
        %v337 = vpop.xlane.xlu0 %336
        %338 = vadd.xlane.f32.xlu0 %v329
        %v339 = vpop.xlane.xlu0 %338
        %340 = vadd.xlane.f32.xlu0 %v330
        %v341 = vpop.xlane.xlu0 %340
        %342 = vadd.xlane.f32.xlu0 %v331
        %v343 = vpop.xlane.xlu0 %342
        %344 = vadd.xlane.f32.xlu0 %v332
        %v345 = vpop.xlane.xlu0 %344
        %346 = vadd.xlane.f32.xlu0 %v333
        %v347 = vpop.xlane.xlu0 %346
        %348 = vadd.xlane.f32.xlu0 %v334
        %v349 = vpop.xlane.xlu0 %348
        %350 = vadd.xlane.f32.xlu0 %v335
        %v351 = vpop.xlane.xlu0 %350
        %v352 = vrcp.pop 128.0
        %v353 = vmul.f32 %v337, %v352
        %v354 = vmul.f32 %v339, %v352
        %v355 = vmul.f32 %v341, %v352
        %v356 = vmul.f32 %v343, %v352
        %v357 = vmul.f32 %v345, %v352
        %v358 = vmul.f32 %v347, %v352
        %v359 = vmul.f32 %v349, %v352
        %v360 = vmul.f32 %v351, %v352
        %v361 = vsub.f32 %v328, %v353
        %v362 = vsub.f32 %v329, %v354
        %v363 = vsub.f32 %v330, %v355
        %v364 = vsub.f32 %v331, %v356
        %v365 = vsub.f32 %v332, %v357
        %v366 = vsub.f32 %v333, %v358
        %v367 = vsub.f32 %v334, %v359
        %v368 = vsub.f32 %v335, %v360
        %v369 = vmul.f32 %v361, %v361
        %v370 = vmul.f32 %v362, %v362
        %v371 = vmul.f32 %v363, %v363
        %v372 = vmul.f32 %v364, %v364
        %v373 = vmul.f32 %v365, %v365
        %v374 = vmul.f32 %v366, %v366
        %v375 = vmul.f32 %v367, %v367
        %v376 = vmul.f32 %v368, %v368
        %377 = vadd.xlane.f32.xlu0 %v369
        %v378 = vpop.xlane.xlu0 %377
        %379 = vadd.xlane.f32.xlu0 %v370
        %v380 = vpop.xlane.xlu0 %379
        %381 = vadd.xlane.f32.xlu0 %v371
        %v382 = vpop.xlane.xlu0 %381
        %383 = vadd.xlane.f32.xlu0 %v372
        %v384 = vpop.xlane.xlu0 %383
        %385 = vadd.xlane.f32.xlu0 %v373
        %v386 = vpop.xlane.xlu0 %385
        %387 = vadd.xlane.f32.xlu0 %v374
        %v388 = vpop.xlane.xlu0 %387
        %389 = vadd.xlane.f32.xlu0 %v375
        %v390 = vpop.xlane.xlu0 %389
        %391 = vadd.xlane.f32.xlu0 %v376
        %v392 = vpop.xlane.xlu0 %391
        %v393 = vmul.f32 %v378, %v352
        %v394 = vmul.f32 %v380, %v352
        %v395 = vmul.f32 %v382, %v352
        %v396 = vmul.f32 %v384, %v352
        %v397 = vmul.f32 %v386, %v352
        %v398 = vmul.f32 %v388, %v352
        %v399 = vmul.f32 %v390, %v352
        %v400 = vmul.f32 %v392, %v352
        %v401 = vadd.f32 %v393, 1e-05
        %v402 = vadd.f32 %v394, 1e-05
        %v403 = vadd.f32 %v395, 1e-05
        %v404 = vadd.f32 %v396, 1e-05
        %v405 = vadd.f32 %v397, 1e-05
        %v406 = vadd.f32 %v398, 1e-05
        %v407 = vadd.f32 %v399, 1e-05
        %v408 = vadd.f32 %v400, 1e-05
        %v409 = vrsqrt.pop %v401
        %v410 = vrsqrt.pop %v402
        %v411 = vrsqrt.pop %v403
        %v412 = vrsqrt.pop %v404
        %v413 = vrsqrt.pop %v405
        %v414 = vrsqrt.pop %v406
        %v415 = vrsqrt.pop %v407
        %v416 = vrsqrt.pop %v408
        %v417 = vmul.f32 %v361, %v409
        %v418 = vmul.f32 %v362, %v410
        %v419 = vmul.f32 %v363, %v411
        %v420 = vmul.f32 %v364, %v412
        %v421 = vmul.f32 %v365, %v413
        %v422 = vmul.f32 %v366, %v414
        %v423 = vmul.f32 %v367, %v415
        %v424 = vmul.f32 %v368, %v416
        %v425 = vld [vmem:[%s1] sm:$0x1]
        %v427 = vlaneseq
        %v428 = vshrl.u32 %v427, 7
        %v429 = vsub.s32 0, %v428
        %v430 = vrot.slane %v425, %v429
        %v432 = vmul.f32 %v417, %v430
        %v433 = vmul.f32 %v418, %v430
        %v434 = vmul.f32 %v419, %v430
        %v435 = vmul.f32 %v420, %v430
        %v436 = vmul.f32 %v421, %v430
        %v437 = vmul.f32 %v422, %v430
        %v438 = vmul.f32 %v423, %v430
        %v439 = vmul.f32 %v424, %v430
        %v440 = vld [vmem:[%s2] sm:$0x1]
        %v442 = vlaneseq
        %v443 = vshrl.u32 %v442, 7
        %v444 = vsub.s32 0, %v443
        %v445 = vrot.slane %v440, %v444
        %v447 = vadd.f32 %v432, %v445
        %v448 = vadd.f32 %v433, %v445
        %v449 = vadd.f32 %v434, %v445
        %v450 = vadd.f32 %v435, %v445
        %v451 = vadd.f32 %v436, %v445
        %v452 = vadd.f32 %v437, %v445
        %v453 = vadd.f32 %v438, %v445
        %v454 = vadd.f32 %v439, %v445
        %v455 = vld [vmem:[#allocation5] sm:$0xff]
        %v456 = vld [vmem:[#allocation5 + $0x8] sm:$0xff]
        %v457 = vld [vmem:[#allocation5 + $0x10] sm:$0xff]
        %v458 = vld [vmem:[#allocation5 + $0x18] sm:$0xff]
        %v459 = vld [vmem:[#allocation5 + $0x20] sm:$0xff]
        %v460 = vld [vmem:[#allocation5 + $0x28] sm:$0xff]
        %v461 = vld [vmem:[#allocation5 + $0x30] sm:$0xff]
        %v462 = vld [vmem:[#allocation5 + $0x38] sm:$0xff]
        %v463 = vld [vmem:[#allocation5 + $0x40] sm:$0xff]
        %v464 = vld [vmem:[#allocation5 + $0x48] sm:$0xff]
        %v465 = vld [vmem:[#allocation5 + $0x50] sm:$0xff]
        %v466 = vld [vmem:[#allocation5 + $0x58] sm:$0xff]
        %v467 = vld [vmem:[#allocation5 + $0x60] sm:$0xff]
        %v468 = vld [vmem:[#allocation5 + $0x68] sm:$0xff]
        %v469 = vld [vmem:[#allocation5 + $0x70] sm:$0xff]
        %v470 = vld [vmem:[#allocation5 + $0x78] sm:$0xff]
        %v471 = vld [vmem:[#allocation5 + $0x80] sm:$0xff]
        %v472 = vld [vmem:[#allocation5 + $0x88] sm:$0xff]
        %v473 = vld [vmem:[#allocation5 + $0x90] sm:$0xff]
        %v474 = vld [vmem:[#allocation5 + $0x98] sm:$0xff]
        %v475 = vld [vmem:[#allocation5 + $0xa0] sm:$0xff]
        %v476 = vld [vmem:[#allocation5 + $0xa8] sm:$0xff]
        %v477 = vld [vmem:[#allocation5 + $0xb0] sm:$0xff]
        %v478 = vld [vmem:[#allocation5 + $0xb8] sm:$0xff]
        %v479 = vld [vmem:[#allocation5 + $0xc0] sm:$0xff]
        %v480 = vld [vmem:[#allocation5 + $0xc8] sm:$0xff]
        %v481 = vld [vmem:[#allocation5 + $0xd0] sm:$0xff]
        %v482 = vld [vmem:[#allocation5 + $0xd8] sm:$0xff]
        %v483 = vld [vmem:[#allocation5 + $0xe0] sm:$0xff]
        %v484 = vld [vmem:[#allocation5 + $0xe8] sm:$0xff]
        %v485 = vld [vmem:[#allocation5 + $0xf0] sm:$0xff]
        %v486 = vld [vmem:[#allocation5 + $0xf8] sm:$0xff]
        %v487 = vld [vmem:[%s4] sm:$0x3]
        %v489 = vlaneseq
        %v490 = vshrl.u32 %v489, 7
        %v491 = vsub.s32 0, %v490
        %v492 = vrot.slane %v487, %v491
        %v493 = vlaneseq
        %v494 = vshrl.u32 %v493, 7
        %v495 = vsub.s32 1, %v494
        %v496 = vrot.slane %v487, %v495
        %499 = vmatprep.subr.mxu0 %v456
        %500 = vmatpush1.msra.mxu0 %v455
        %501 = vmatprep.subr.mxu0 %v458
        %502 = vmatpush1.msra.mxu0 %v457
        %503 = vmatprep.subr.mxu0 %v460
        %504 = vmatpush1.msra.mxu0 %v459
        %505 = vmatprep.subr.mxu0 %v462
        %506 = vmatpush1.msra.mxu0 %v461
        %507 = vmatprep.subr.mxu0 %v464
        %508 = vmatpush1.msra.mxu0 %v463
        %509 = vmatprep.subr.mxu0 %v466
        %510 = vmatpush1.msra.mxu0 %v465
        %511 = vmatprep.subr.mxu0 %v468
        %512 = vmatpush1.msra.mxu0 %v467
        %513 = vmatprep.subr.mxu0 %v470
        %514 = vmatpush1.msra.mxu0 %v469
        %515 = vmatprep.subr.mxu0 %v472
        %516 = vmatpush1.msra.mxu0 %v471
        %517 = vmatprep.subr.mxu0 %v474
        %518 = vmatpush1.msra.mxu0 %v473
        %519 = vmatprep.subr.mxu0 %v476
        %520 = vmatpush1.msra.mxu0 %v475
        %521 = vmatprep.subr.mxu0 %v478
        %522 = vmatpush1.msra.mxu0 %v477
        %523 = vmatprep.subr.mxu0 %v480
        %524 = vmatpush1.msra.mxu0 %v479
        %525 = vmatprep.subr.mxu0 %v482
        %526 = vmatpush1.msra.mxu0 %v481
        %527 = vmatprep.subr.mxu0 %v484
        %528 = vmatpush1.msra.mxu0 %v483
        %529 = vmatprep.subr.mxu0 %v486
        %530 = vmatpush1.msra.mxu0 %v485
        %531 = vmatprep.subr.mxu0 0.0
        %532 = vmatpush1.msra.mxu0 0.0
        %533 = vmatprep.subr.mxu0 0.0
        %534 = vmatpush1.msra.mxu0 0.0
        %535 = vmatprep.subr.mxu0 0.0
        %536 = vmatpush1.msra.mxu0 0.0
        %537 = vmatprep.subr.mxu0 0.0
        %538 = vmatpush1.msra.mxu0 0.0
        %539 = vmatprep.subr.mxu0 0.0
        %540 = vmatpush1.msra.mxu0 0.0
        %541 = vmatprep.subr.mxu0 0.0
        %542 = vmatpush1.msra.mxu0 0.0
        %543 = vmatprep.subr.mxu0 0.0
        %544 = vmatpush1.msra.mxu0 0.0
        %545 = vmatprep.subr.mxu0 0.0
        %546 = vmatpush1.msra.mxu0 0.0
        %547 = vmatprep.subr.mxu0 0.0
        %548 = vmatpush1.msra.mxu0 0.0
        %549 = vmatprep.subr.mxu0 0.0
        %550 = vmatpush1.msra.mxu0 0.0
        %551 = vmatprep.subr.mxu0 0.0
        %552 = vmatpush1.msra.mxu0 0.0
        %553 = vmatprep.subr.mxu0 0.0
        %554 = vmatpush1.msra.mxu0 0.0
        %555 = vmatprep.subr.mxu0 0.0
        %556 = vmatpush1.msra.mxu0 0.0
        %557 = vmatprep.subr.mxu0 0.0
        %558 = vmatpush1.msra.mxu0 0.0
        %559 = vmatprep.subr.mxu0 0.0
        %560 = vmatpush1.msra.mxu0 0.0
        %561 = vmatprep.subr.mxu0 0.0
        %562 = vmatpush1.msra.mxu0 0.0
        %563 = vmatprep.mubr.f32.mxu0 0.0
        %564 = vmatmul.mubr.f32.gmra.mrb[0].mxu0 %v447
        %v565 = vpop.f32.mrb[0].mxu0
        %v566 = vadd.f32 %v492, %v565
        %v567 = vpop.f32.mrb[0].mxu0
        %v568 = vadd.f32 %v496, %v567
        %569 = vmatprep.mubr.f32.mxu0 0.0
        %570 = vmatmul.mubr.f32.gmra.mrb[0].mxu0 %v448
        %v571 = vpop.f32.mrb[0].mxu0
        %v572 = vadd.f32 %v492, %v571
        %v573 = vpop.f32.mrb[0].mxu0
        %v574 = vadd.f32 %v496, %v573
        %575 = vmatprep.mubr.f32.mxu0 0.0
        %576 = vmatmul.mubr.f32.gmra.mrb[0].mxu0 %v449
        %v577 = vpop.f32.mrb[0].mxu0
        %v578 = vadd.f32 %v492, %v577
        %v579 = vpop.f32.mrb[0].mxu0
        %v580 = vadd.f32 %v496, %v579
        %581 = vmatprep.mubr.f32.mxu0 0.0
        %582 = vmatmul.mubr.f32.gmra.mrb[0].mxu0 %v450
        %v583 = vpop.f32.mrb[0].mxu0
        %v584 = vadd.f32 %v492, %v583
        %v585 = vpop.f32.mrb[0].mxu0
        %v586 = vadd.f32 %v496, %v585
        %587 = vmatprep.mubr.f32.mxu0 0.0
        %588 = vmatmul.mubr.f32.gmra.mrb[0].mxu0 %v451
        %v589 = vpop.f32.mrb[0].mxu0
        %v590 = vadd.f32 %v492, %v589
        %v591 = vpop.f32.mrb[0].mxu0
        %v592 = vadd.f32 %v496, %v591
        %593 = vmatprep.mubr.f32.mxu0 0.0
        %594 = vmatmul.mubr.f32.gmra.mrb[0].mxu0 %v452
        %v595 = vpop.f32.mrb[0].mxu0
        %v596 = vadd.f32 %v492, %v595
        %v597 = vpop.f32.mrb[0].mxu0
        %v598 = vadd.f32 %v496, %v597
        %599 = vmatprep.mubr.f32.mxu0 0.0
        %600 = vmatmul.mubr.f32.gmra.mrb[0].mxu0 %v453
        %v601 = vpop.f32.mrb[0].mxu0
        %v602 = vadd.f32 %v492, %v601
        %v603 = vpop.f32.mrb[0].mxu0
        %v604 = vadd.f32 %v496, %v603
        %605 = vmatprep.mubr.f32.mxu0 0.0
        %606 = vmatmul.mubr.f32.gmra.mrb[0].mxu0 %v454
        %v607 = vpop.f32.mrb[0].mxu0
        %v608 = vadd.f32 %v492, %v607
        %v609 = vpop.f32.mrb[0].mxu0
        %v610 = vadd.f32 %v496, %v609
        %611 = vdwg.mxu0
        %v612 = vmul.f32 %v566, %v566
        %v613 = vmul.f32 %v568, %v568
        %v614 = vmul.f32 %v572, %v572
        %v615 = vmul.f32 %v574, %v574
        %v616 = vmul.f32 %v578, %v578
        %v617 = vmul.f32 %v580, %v580
        %v618 = vmul.f32 %v584, %v584
        %v619 = vmul.f32 %v586, %v586
        %v620 = vmul.f32 %v590, %v590
        %v621 = vmul.f32 %v592, %v592
        %v622 = vmul.f32 %v596, %v596
        %v623 = vmul.f32 %v598, %v598
        %v624 = vmul.f32 %v602, %v602
        %v625 = vmul.f32 %v604, %v604
        %v626 = vmul.f32 %v608, %v608
        %v627 = vmul.f32 %v610, %v610
        %v628 = vmul.f32 %v566, %v612
        %v629 = vmul.f32 %v568, %v613
        %v630 = vmul.f32 %v572, %v614
        %v631 = vmul.f32 %v574, %v615
        %v632 = vmul.f32 %v578, %v616
        %v633 = vmul.f32 %v580, %v617
        %v634 = vmul.f32 %v584, %v618
        %v635 = vmul.f32 %v586, %v619
        %v636 = vmul.f32 %v590, %v620
        %v637 = vmul.f32 %v592, %v621
        %v638 = vmul.f32 %v596, %v622
        %v639 = vmul.f32 %v598, %v623
        %v640 = vmul.f32 %v602, %v624
        %v641 = vmul.f32 %v604, %v625
        %v642 = vmul.f32 %v608, %v626
        %v643 = vmul.f32 %v610, %v627
        %v644 = vmul.f32 %v628, 0.044715
        %v645 = vmul.f32 %v629, 0.044715
        %v646 = vmul.f32 %v630, 0.044715
        %v647 = vmul.f32 %v631, 0.044715
        %v648 = vmul.f32 %v632, 0.044715
        %v649 = vmul.f32 %v633, 0.044715
        %v650 = vmul.f32 %v634, 0.044715
        %v651 = vmul.f32 %v635, 0.044715
        %v652 = vmul.f32 %v636, 0.044715
        %v653 = vmul.f32 %v637, 0.044715
        %v654 = vmul.f32 %v638, 0.044715
        %v655 = vmul.f32 %v639, 0.044715
        %v656 = vmul.f32 %v640, 0.044715
        %v657 = vmul.f32 %v641, 0.044715
        %v658 = vmul.f32 %v642, 0.044715
        %v659 = vmul.f32 %v643, 0.044715
        %v660 = vadd.f32 %v566, %v644
        %v661 = vadd.f32 %v568, %v645
        %v662 = vadd.f32 %v572, %v646
        %v663 = vadd.f32 %v574, %v647
        %v664 = vadd.f32 %v578, %v648
        %v665 = vadd.f32 %v580, %v649
        %v666 = vadd.f32 %v584, %v650
        %v667 = vadd.f32 %v586, %v651
        %v668 = vadd.f32 %v590, %v652
        %v669 = vadd.f32 %v592, %v653
        %v670 = vadd.f32 %v596, %v654
        %v671 = vadd.f32 %v598, %v655
        %v672 = vadd.f32 %v602, %v656
        %v673 = vadd.f32 %v604, %v657
        %v674 = vadd.f32 %v608, %v658
        %v675 = vadd.f32 %v610, %v659
        %v676 = vmul.f32 %v660, 0.7978846
        %v677 = vmul.f32 %v661, 0.7978846
        %v678 = vmul.f32 %v662, 0.7978846
        %v679 = vmul.f32 %v663, 0.7978846
        %v680 = vmul.f32 %v664, 0.7978846
        %v681 = vmul.f32 %v665, 0.7978846
        %v682 = vmul.f32 %v666, 0.7978846
        %v683 = vmul.f32 %v667, 0.7978846
        %v684 = vmul.f32 %v668, 0.7978846
        %v685 = vmul.f32 %v669, 0.7978846
        %v686 = vmul.f32 %v670, 0.7978846
        %v687 = vmul.f32 %v671, 0.7978846
        %v688 = vmul.f32 %v672, 0.7978846
        %v689 = vmul.f32 %v673, 0.7978846
        %v690 = vmul.f32 %v674, 0.7978846
        %v691 = vmul.f32 %v675, 0.7978846
        %v692 = vtanh.pop %v676
        %v693 = vtanh.pop %v677
        %v694 = vtanh.pop %v678
        %v695 = vtanh.pop %v679
        %v696 = vtanh.pop %v680
        %v697 = vtanh.pop %v681
        %v698 = vtanh.pop %v682
        %v699 = vtanh.pop %v683
        %v700 = vtanh.pop %v684
        %v701 = vtanh.pop %v685
        %v702 = vtanh.pop %v686
        %v703 = vtanh.pop %v687
        %v704 = vtanh.pop %v688
        %v705 = vtanh.pop %v689
        %v706 = vtanh.pop %v690
        %v707 = vtanh.pop %v691
        %v708 = vadd.f32 %v692, 1.0
        %v709 = vadd.f32 %v693, 1.0
        %v710 = vadd.f32 %v694, 1.0
        %v711 = vadd.f32 %v695, 1.0
        %v712 = vadd.f32 %v696, 1.0
        %v713 = vadd.f32 %v697, 1.0
        %v714 = vadd.f32 %v698, 1.0
        %v715 = vadd.f32 %v699, 1.0
        %v716 = vadd.f32 %v700, 1.0
        %v717 = vadd.f32 %v701, 1.0
        %v718 = vadd.f32 %v702, 1.0
        %v719 = vadd.f32 %v703, 1.0
        %v720 = vadd.f32 %v704, 1.0
        %v721 = vadd.f32 %v705, 1.0
        %v722 = vadd.f32 %v706, 1.0
        %v723 = vadd.f32 %v707, 1.0
        %v724 = vmul.f32 %v708, 0.5
        %v725 = vmul.f32 %v709, 0.5
        %v726 = vmul.f32 %v710, 0.5
        %v727 = vmul.f32 %v711, 0.5
        %v728 = vmul.f32 %v712, 0.5
        %v729 = vmul.f32 %v713, 0.5
        %v730 = vmul.f32 %v714, 0.5
        %v731 = vmul.f32 %v715, 0.5
        %v732 = vmul.f32 %v716, 0.5
        %v733 = vmul.f32 %v717, 0.5
        %v734 = vmul.f32 %v718, 0.5
        %v735 = vmul.f32 %v719, 0.5
        %v736 = vmul.f32 %v720, 0.5
        %v737 = vmul.f32 %v721, 0.5
        %v738 = vmul.f32 %v722, 0.5
        %v739 = vmul.f32 %v723, 0.5
        %v740 = vmul.f32 %v566, %v724
        %v741 = vmul.f32 %v568, %v725
        %v742 = vmul.f32 %v572, %v726
        %v743 = vmul.f32 %v574, %v727
        %v744 = vmul.f32 %v578, %v728
        %v745 = vmul.f32 %v580, %v729
        %v746 = vmul.f32 %v584, %v730
        %v747 = vmul.f32 %v586, %v731
        %v748 = vmul.f32 %v590, %v732
        %v749 = vmul.f32 %v592, %v733
        %v750 = vmul.f32 %v596, %v734
        %v751 = vmul.f32 %v598, %v735
        %v752 = vmul.f32 %v602, %v736
        %v753 = vmul.f32 %v604, %v737
        %v754 = vmul.f32 %v608, %v738
        %v755 = vmul.f32 %v610, %v739
        %v756 = vld [vmem:[#allocation7] sm:$0xff]
        %v757 = vld [vmem:[#allocation7 + $0x8] sm:$0xff]
        %v758 = vld [vmem:[#allocation7 + $0x10] sm:$0xff]
        %v759 = vld [vmem:[#allocation7 + $0x18] sm:$0xff]
        %v760 = vld [vmem:[#allocation7 + $0x20] sm:$0xff]
        %v761 = vld [vmem:[#allocation7 + $0x28] sm:$0xff]
        %v762 = vld [vmem:[#allocation7 + $0x30] sm:$0xff]
        %v763 = vld [vmem:[#allocation7 + $0x38] sm:$0xff]
        %v764 = vld [vmem:[#allocation7 + $0x40] sm:$0xff]
        %v765 = vld [vmem:[#allocation7 + $0x48] sm:$0xff]
        %v766 = vld [vmem:[#allocation7 + $0x50] sm:$0xff]
        %v767 = vld [vmem:[#allocation7 + $0x58] sm:$0xff]
        %v768 = vld [vmem:[#allocation7 + $0x60] sm:$0xff]
        %v769 = vld [vmem:[#allocation7 + $0x68] sm:$0xff]
        %v770 = vld [vmem:[#allocation7 + $0x70] sm:$0xff]
        %v771 = vld [vmem:[#allocation7 + $0x78] sm:$0xff]
        %v772 = vld [vmem:[#allocation7 + $0x80] sm:$0xff]
        %v773 = vld [vmem:[#allocation7 + $0x88] sm:$0xff]
        %v774 = vld [vmem:[#allocation7 + $0x90] sm:$0xff]
        %v775 = vld [vmem:[#allocation7 + $0x98] sm:$0xff]
        %v776 = vld [vmem:[#allocation7 + $0xa0] sm:$0xff]
        %v777 = vld [vmem:[#allocation7 + $0xa8] sm:$0xff]
        %v778 = vld [vmem:[#allocation7 + $0xb0] sm:$0xff]
        %v779 = vld [vmem:[#allocation7 + $0xb8] sm:$0xff]
        %v780 = vld [vmem:[#allocation7 + $0xc0] sm:$0xff]
        %v781 = vld [vmem:[#allocation7 + $0xc8] sm:$0xff]
        %v782 = vld [vmem:[#allocation7 + $0xd0] sm:$0xff]
        %v783 = vld [vmem:[#allocation7 + $0xd8] sm:$0xff]
        %v784 = vld [vmem:[#allocation7 + $0xe0] sm:$0xff]
        %v785 = vld [vmem:[#allocation7 + $0xe8] sm:$0xff]
        %v786 = vld [vmem:[#allocation7 + $0xf0] sm:$0xff]
        %v787 = vld [vmem:[#allocation7 + $0xf8] sm:$0xff]
        %v788 = vld [vmem:[%s6] sm:$0x1]
        %v790 = vlaneseq
        %v791 = vshrl.u32 %v790, 7
        %v792 = vsub.s32 0, %v791
        %v793 = vrot.slane %v788, %v792
        %795 = vmatprep.subr.mxu0 0.0
        %796 = vmatpush1.msra.mxu0 %v756
        %797 = vmatprep.subr.mxu0 0.0
        %798 = vmatpush1.msra.mxu0 %v757
        %799 = vmatprep.subr.mxu0 0.0
        %800 = vmatpush1.msra.mxu0 %v758
        %801 = vmatprep.subr.mxu0 0.0
        %802 = vmatpush1.msra.mxu0 %v759
        %803 = vmatprep.subr.mxu0 0.0
        %804 = vmatpush1.msra.mxu0 %v760
        %805 = vmatprep.subr.mxu0 0.0
        %806 = vmatpush1.msra.mxu0 %v761
        %807 = vmatprep.subr.mxu0 0.0
        %808 = vmatpush1.msra.mxu0 %v762
        %809 = vmatprep.subr.mxu0 0.0
        %810 = vmatpush1.msra.mxu0 %v763
        %811 = vmatprep.subr.mxu0 0.0
        %812 = vmatpush1.msra.mxu0 %v764
        %813 = vmatprep.subr.mxu0 0.0
        %814 = vmatpush1.msra.mxu0 %v765
        %815 = vmatprep.subr.mxu0 0.0
        %816 = vmatpush1.msra.mxu0 %v766
        %817 = vmatprep.subr.mxu0 0.0
        %818 = vmatpush1.msra.mxu0 %v767
        %819 = vmatprep.subr.mxu0 0.0
        %820 = vmatpush1.msra.mxu0 %v768
        %821 = vmatprep.subr.mxu0 0.0
        %822 = vmatpush1.msra.mxu0 %v769
        %823 = vmatprep.subr.mxu0 0.0
        %824 = vmatpush1.msra.mxu0 %v770
        %825 = vmatprep.subr.mxu0 0.0
        %826 = vmatpush1.msra.mxu0 %v771
        %827 = vmatprep.subr.mxu0 0.0
        %828 = vmatpush1.msra.mxu0 %v772
        %829 = vmatprep.subr.mxu0 0.0
        %830 = vmatpush1.msra.mxu0 %v773
        %831 = vmatprep.subr.mxu0 0.0
        %832 = vmatpush1.msra.mxu0 %v774
        %833 = vmatprep.subr.mxu0 0.0
        %834 = vmatpush1.msra.mxu0 %v775
        %835 = vmatprep.subr.mxu0 0.0
        %836 = vmatpush1.msra.mxu0 %v776
        %837 = vmatprep.subr.mxu0 0.0
        %838 = vmatpush1.msra.mxu0 %v777
        %839 = vmatprep.subr.mxu0 0.0
        %840 = vmatpush1.msra.mxu0 %v778
        %841 = vmatprep.subr.mxu0 0.0
        %842 = vmatpush1.msra.mxu0 %v779
        %843 = vmatprep.subr.mxu0 0.0
        %844 = vmatpush1.msra.mxu0 %v780
        %845 = vmatprep.subr.mxu0 0.0
        %846 = vmatpush1.msra.mxu0 %v781
        %847 = vmatprep.subr.mxu0 0.0
        %848 = vmatpush1.msra.mxu0 %v782
        %849 = vmatprep.subr.mxu0 0.0
        %850 = vmatpush1.msra.mxu0 %v783
        %851 = vmatprep.subr.mxu0 0.0
        %852 = vmatpush1.msra.mxu0 %v784
        %853 = vmatprep.subr.mxu0 0.0
        %854 = vmatpush1.msra.mxu0 %v785
        %855 = vmatprep.subr.mxu0 0.0
        %856 = vmatpush1.msra.mxu0 %v786
        %857 = vmatprep.subr.mxu0 0.0
        %858 = vmatpush1.msra.mxu0 %v787
        %859 = vmatprep.mubr.f32.mxu0 %v741
        %860 = vmatmul.mubr.f32.gmra.mrb[0].mxu0 %v740
        %v861 = vpop.f32.mrb[0].mxu0
        %v862 = vadd.f32 %v793, %v861
        %v863 = vpop.f32.mrb[0].mxu0
        %864 = vmatprep.mubr.f32.mxu0 %v743
        %865 = vmatmul.mubr.f32.gmra.mrb[0].mxu0 %v742
        %v866 = vpop.f32.mrb[0].mxu0
        %v867 = vadd.f32 %v793, %v866
        %v868 = vpop.f32.mrb[0].mxu0
        %869 = vmatprep.mubr.f32.mxu0 %v745
        %870 = vmatmul.mubr.f32.gmra.mrb[0].mxu0 %v744
        %v871 = vpop.f32.mrb[0].mxu0
        %v872 = vadd.f32 %v793, %v871
        %v873 = vpop.f32.mrb[0].mxu0
        %874 = vmatprep.mubr.f32.mxu0 %v747
        %875 = vmatmul.mubr.f32.gmra.mrb[0].mxu0 %v746
        %v876 = vpop.f32.mrb[0].mxu0
        %v877 = vadd.f32 %v793, %v876
        %v878 = vpop.f32.mrb[0].mxu0
        %879 = vmatprep.mubr.f32.mxu0 %v749
        %880 = vmatmul.mubr.f32.gmra.mrb[0].mxu0 %v748
        %v881 = vpop.f32.mrb[0].mxu0
        %v882 = vadd.f32 %v793, %v881
        %v883 = vpop.f32.mrb[0].mxu0
        %884 = vmatprep.mubr.f32.mxu0 %v751
        %885 = vmatmul.mubr.f32.gmra.mrb[0].mxu0 %v750
        %v886 = vpop.f32.mrb[0].mxu0
        %v887 = vadd.f32 %v793, %v886
        %v888 = vpop.f32.mrb[0].mxu0
        %889 = vmatprep.mubr.f32.mxu0 %v753
        %890 = vmatmul.mubr.f32.gmra.mrb[0].mxu0 %v752
        %v891 = vpop.f32.mrb[0].mxu0
        %v892 = vadd.f32 %v793, %v891
        %v893 = vpop.f32.mrb[0].mxu0
        %894 = vmatprep.mubr.f32.mxu0 %v755
        %895 = vmatmul.mubr.f32.gmra.mrb[0].mxu0 %v754
        %v896 = vpop.f32.mrb[0].mxu0
        %v897 = vadd.f32 %v793, %v896
        %v898 = vpop.f32.mrb[0].mxu0
        %899 = vdwg.mxu0
        %900 = vst [vmem:[%s325] sm:$0xff] %v862
        %901 = vst [vmem:[%s325 + $0x8] sm:$0xff] %v867
        %902 = vst [vmem:[%s325 + $0x10] sm:$0xff] %v872
        %903 = vst [vmem:[%s325 + $0x18] sm:$0xff] %v877
        %904 = vst [vmem:[%s325 + $0x20] sm:$0xff] %v882
        %905 = vst [vmem:[%s325 + $0x28] sm:$0xff] %v887
        %906 = vst [vmem:[%s325 + $0x30] sm:$0xff] %v892
        %907 = vst [vmem:[%s325 + $0x38] sm:$0xff] %v897
        %s908 = sand.u32 %s185, 1
        %s909 = scalar_lea.sflag [#allocation4], %s908
        %s910 = sand.u32 %s185, 1
        %s911 = smul.addr %s910, 64
        %s912 = scalar_lea.vmem [#allocation8], %s911
        // Predicated region
        $region61: #{tpu_custom_call.1} parent=47 // pred_check
          %p913 = pneg %p195
        $region62: #{tpu_custom_call.1} parent=47 // pred_check_branch
          %915 = sbr.rel (%p913) target = $region64
        $region63: #{tpu_custom_call.1} parent=47 // pred_region
          %s916 = smul.u32 8, %s25
          %s918 = ssub.s32 1024, 1024
          %919 = vsyncadd %s909, %s918
          %s920 = smul.addr %s916, 128
          %s921 = scalar_lea.hbm %s7, %s920
          %s922 = sshll.u32 %s912, 4
          %s923 = int_to_ptr.vmem [resolvable:$true] %s922
          %928 = dma.vmem_to_hbm [thread:$0]  %s923, 1024, %s921, %s909, 128, 128, 8
        $region64: #{tpu_custom_call.1} parent=47 // pred_fallthru
          _
      $region48: #{tpu_custom_call.1} parent=5 // pred_fallthru
        _
      %p929 = scmp.le.s32.totalorder 2, %s20
      // Predicated region
      $region65: #{tpu_custom_call.1} parent=5 // pred_check
        %p930 = pneg %p929
      $region66: #{tpu_custom_call.1} parent=5 // pred_check_branch
        %932 = sbr.rel (%p930) target = $region68
      $region67: #{tpu_custom_call.1} parent=5 // pred_region
        %s933 = ssub.s32 %s20, 2
        // Predicated region
        $region69: #{tpu_custom_call.1} parent=67 // pred_check
          %p934 = pneg %p201
        $region70: #{tpu_custom_call.1} parent=67 // pred_check_branch
          %936 = sbr.rel (%p934) target = $region72
        $region71: #{tpu_custom_call.1} parent=67 // pred_region
          %s937 = sand.u32 %s186, 1
          %s938 = scalar_lea.sflag [#allocation4], %s937
          %s939 = sand.u32 %s186, 1
          %s940 = smul.addr %s939, 64
          %s941 = scalar_lea.vmem [#allocation8], %s940
          %942 = dma.done %s938, 1024
        $region72: #{tpu_custom_call.1} parent=67 // pred_fallthru
          _
      $region68: #{tpu_custom_call.1} parent=5 // pred_fallthru
        _
    $region6: #{tpu_custom_call.1} parent=1 // loop_footer
      %s24 = sadd.s32 1, %s20
    $region7: #{tpu_custom_call.1} parent=1 // loop_footer_branch
      %19 = sbr.rel target = $region3
    $region8: #{tpu_custom_call.1} parent=1 // loop_exit
      _
    %943 = vsyncpa [#allocation3], 1
    %s944 = scalar_lea.sflag [#allocation3], 1
    %945 = vsyncpa %s944, 1
    %946 = vsyncpa [#allocation6], 1
    %947 = vsyncpa [#allocation4], 1
    %s948 = scalar_lea.sflag [#allocation4], 1
    %949 = vsyncpa %s948, 1

</llo_original>
